<compile_context>
chip_gen: v6e
topology: v6e:2x2x1
jax: 0.10.0
libtpu: 0.0.40
codegen_flags: <defaults>
</compile_context>

<pallas_src>
import functools
import math

import jax
import jax.numpy as jnp
from jax.experimental import pallas as pl
from jax.experimental.pallas import tpu as pltpu


# v7x has 64 MiB physical VMEM per TensorCore -> keep the scoped limit at
# 48 MiB (plenty of headroom on v5e/v6e's 128 MiB).
_VMEM_LIMIT = 48 * 1024 * 1024


def _round_up(x, m):
    return ((x + m - 1) // m) * m


def _pick_tile(dim, target, align):
    """Largest tile <= target that divides dim and is a multiple of `align`;
    falls back to the full dim (block == array extent is always legal)."""
    if dim <= target:
        return dim
    t = (target // align) * align
    while t >= align:
        if dim % t == 0:
            return t
        t -= align
    return dim


def _largest_divisor_leq(n, target):
    t = min(target, n)
    while n % t:
        t -= 1
    return t


# ------------------------------ linear kernel ------------------------------ #

def _linear_kernel(x_ref, w_ref, b_ref, o_ref, acc_ref):
    # x: (tm, tk) bf16, w: (tk, tn) bf16, b: (1, tn) f32 -> o: (tm, tn)
    k = pl.program_id(2)

    @pl.when(k == 0)
    def _init():
        acc_ref[...] = jnp.zeros_like(acc_ref)

    acc_ref[...] += jnp.dot(x_ref[...], w_ref[...],
                            preferred_element_type=jnp.float32)

    @pl.when(k == pl.num_programs(2) - 1)
    def _finalize():
        o_ref[...] = (acc_ref[...] + b_ref[...]).astype(o_ref.dtype)


def linear(x2d, w, b, *, out_dtype=None, row_block=256, col_block=512,
           k_block=512):
    n, d_in = x2d.shape
    d_out = w.shape[1]
    out_dtype = x2d.dtype if out_dtype is None else out_dtype

    # MXU operands in the weight dtype (bf16 after prepare_params).
    x2d = x2d.astype(w.dtype)

    # Row tiling: pad ragged row counts instead of one giant tile.
    tm = row_block if n >= row_block else _round_up(n, 8)
    n_pad = _round_up(n, tm)
    if n_pad != n:
        x2d = jnp.pad(x2d, ((0, n_pad - n), (0, 0)))

    tn = _pick_tile(d_out, col_block, 128)
    tk = _pick_tile(d_in, k_block, 128)

    out = pl.pallas_call(
        _linear_kernel,
        out_shape=jax.ShapeDtypeStruct((n_pad, d_out), out_dtype),
        grid_spec=pltpu.PrefetchScalarGridSpec(
            num_scalar_prefetch=0,
            grid=(n_pad // tm, d_out // tn, d_in // tk),
            in_specs=[
                pl.BlockSpec((tm, tk), lambda i, j, k: (i, k)),
                pl.BlockSpec((tk, tn), lambda i, j, k: (k, j)),
                pl.BlockSpec((1, tn), lambda i, j, k: (0, j)),
            ],
            out_specs=pl.BlockSpec((tm, tn), lambda i, j, k: (i, j)),
            scratch_shapes=[pltpu.VMEM((tm, tn), jnp.float32)]),
        compiler_params=pltpu.CompilerParams(
            dimension_semantics=("parallel", "parallel", "arbitrary"),
            vmem_limit_bytes=_VMEM_LIMIT),
    )(x2d, w, b)
    return out[:n] if n_pad != n else out


# ------------------------ flash attention kernel --------------------------- #

def _flash_attn_kernel(q_ref, k_ref, v_ref, o_ref, m_ref, l_ref, acc_ref,
                       *, causal, q_blk, kv_blk):
    qi = pl.program_id(1)
    ki = pl.program_id(2)

    @pl.when(ki == 0)
    def _init():
        m_ref[...] = jnp.full(m_ref.shape, -jnp.inf, dtype=m_ref.dtype)
        l_ref[...] = jnp.zeros(l_ref.shape, dtype=l_ref.dtype)
        acc_ref[...] = jnp.zeros(acc_ref.shape, dtype=acc_ref.dtype)

    def _compute(apply_mask):
        # Softmax scale is pre-folded into the Q columns of Wqkv (see
        # prepare_params), so no per-step scaling here.  bf16 MXU operands,
        # f32 accumulation, f32 softmax math.
        q = q_ref[...]                                   # (hb, tq, D) bf16
        k = k_ref[...]                                   # (hb, tkv, D) bf16
        s = jax.lax.dot_general(
            q, k, (((2,), (2,)), ((0,), (0,))),
            preferred_element_type=jnp.float32)          # (hb, tq, tkv) f32
        if apply_mask:
            hb, tq, tkv = s.shape
            # torch semantics: triu(full((T, S), -1e4), 1) -- local query-row
            # index vs global key-column index (matches the reference module
            # exactly, including the KV-cache case).
            row = jax.lax.broadcasted_iota(jnp.int32, (tq, tkv), 0) + qi * q_blk
            col = jax.lax.broadcasted_iota(jnp.int32, (tq, tkv), 1) + ki * kv_blk
            s = s + jnp.where(col > row, -10000.0, 0.0)[None, :, :]
        m_prev = m_ref[...]
        m_new = jnp.maximum(m_prev, jnp.max(s, axis=-1, keepdims=True))
        alpha = jnp.exp(m_prev - m_new)
        p = jnp.exp(s - m_new)
        l_ref[...] = alpha * l_ref[...] + jnp.sum(p, axis=-1, keepdims=True)
        acc_ref[...] = alpha * acc_ref[...] + jax.lax.dot_general(
            p.astype(v_ref.dtype), v_ref[...], (((2,), (1,)), ((0,), (0,))),
            preferred_element_type=jnp.float32)          # (hb, tq, D) f32
        m_ref[...] = m_new

    if causal:
        # Any visible key in this KV block?  (If not, skip compute entirely;
        # the clamped K/V index_map already suppressed the DMA for it.)
        visible = ki * kv_blk <= qi * q_blk + (q_blk - 1)
        # Only diagonal-straddling blocks need the mask build + add.
        straddles = ki * kv_blk + (kv_blk - 1) > qi * q_blk
        pl.when(visible & straddles)(lambda: _compute(True))
        pl.when(visible & jnp.logical_not(straddles))(lambda: _compute(False))
    else:
        _compute(False)

    @pl.when(ki == pl.num_programs(2) - 1)
    def _finalize():
        # Exact divide (finalize only) for parity with the reference softmax.
        o_ref[...] = (acc_ref[...] / l_ref[...]).astype(o_ref.dtype)


def flash_attention(q, k, v, causal, *, q_block=256, kv_block=512,
                    head_block=8):
    # q: (BH, T, D), k/v: (BH, S, D); BH = batch * heads (independent rows).
    bh, t, d = q.shape
    s = k.shape[1]
    hb = _largest_divisor_leq(bh, head_block)
    tq = _pick_tile(t, q_block, 8)
    tkv = _pick_tile(s, kv_block, 8)
    # TODO(synk): pad + mask ragged sequence lengths instead of falling back to
    # the full extent when no aligned divisor exists.

    if causal:
        def kv_map(g, i, j):
            # Last KV block containing any visible key for this Q block
            # (local-row causal semantics).  Clamping means fully-masked
            # blocks revisit the previous block index -> no DMA issued.
            last = (i * tq + (tq - 1)) // tkv
            return (g, jnp.minimum(j, last), 0)
    else:
        def kv_map(g, i, j):
            return (g, j, 0)

    kern = functools.partial(_flash_attn_kernel, causal=causal,
                             q_blk=tq, kv_blk=tkv)
    return pl.pallas_call(
        kern,
        out_shape=jax.ShapeDtypeStruct((bh, t, d), q.dtype),
        grid_spec=pltpu.PrefetchScalarGridSpec(
            num_scalar_prefetch=0,
            grid=(bh // hb, t // tq, s // tkv),
            in_specs=[
                pl.BlockSpec((hb, tq, d), lambda g, i, j: (g, i, 0)),
                pl.BlockSpec((hb, tkv, d), kv_map),
                pl.BlockSpec((hb, tkv, d), kv_map),
            ],
            out_specs=pl.BlockSpec((hb, tq, d), lambda g, i, j: (g, i, 0)),
            scratch_shapes=[
                # NOTE: last dim 1 pads to 128 lanes in VMEM; with small hb the
                # waste is a couple of MiB and keeps the per-step broadcast
                # layout-free (a (hb, tq) 2D scratch would force a relayout
                # every KV step).
                pltpu.VMEM((hb, tq, 1), jnp.float32),   # running max m
                pltpu.VMEM((hb, tq, 1), jnp.float32),   # running denom l
                pltpu.VMEM((hb, tq, d), jnp.float32),   # output accumulator
            ]),
        compiler_params=pltpu.CompilerParams(
            dimension_semantics=("parallel", "parallel", "arbitrary"),
            vmem_limit_bytes=_VMEM_LIMIT),
    )(q, k, v)


# ------------------------------- JAX glue ----------------------------------- #

def make_rotary(dim, max_seq_len):
    inv_freq = jnp.array(
        [1.0 / 10000.0 ** (i / dim) for i in range(0, dim, 2)],
        dtype=jnp.float32).reshape(1, -1)
    t = jnp.arange(max_seq_len, dtype=jnp.float32).reshape(-1, 1)
    freqs = t @ inv_freq
    return jnp.sin(freqs), jnp.cos(freqs)   # each (max_seq_len, dim//2)


def prepare_params(raw, num_heads, head_dim, compute_dtype=jnp.bfloat16):
    """Cast matmul weights to bf16 and fold the softmax scale into the Q
    output columns of Wqkv (rotary is linear, so pre-scaling Q is exact)."""
    n_embd = num_heads * head_dim
    scale = 1.0 / math.sqrt(head_dim)
    col_scale = jnp.concatenate(
        [jnp.full((n_embd,), scale, jnp.float32),
         jnp.ones((2 * n_embd,), jnp.float32)])[None, :]
    return {
        "wqkv_w": (raw["wqkv_w"] * col_scale).astype(compute_dtype),
        "wqkv_b": (raw["wqkv_b"] * col_scale).astype(jnp.float32),
        "out_w": raw["out_w"].astype(compute_dtype),
        "out_b": raw["out_b"].astype(jnp.float32),
    }


def apply_rotary_emb_qkv(qkv, sin, cos, seqlen_offset):
    # qkv: (B, T, 3, H, D).  Returns head-major (B, H, T, D) q/k/v — the
    # layout transpose is folded into the rotary elementwise math so XLA
    # fuses it instead of emitting separate HBM transpose passes.
    # TODO(synk): fuse the rotary half-rotation (pltpu.roll) into the QKV
    # projection kernel epilogue instead of this JAX slice/concat chain.
    _, seqlen, three, _, _ = qkv.shape
    assert three == 3
    rotary_dim = cos.shape[1] * 2
    half = rotary_dim // 2
    c = cos[seqlen_offset:seqlen_offset + seqlen][None, None, :, :]  # (1,1,T,h)
    s = sin[seqlen_offset:seqlen_offset + seqlen][None, None, :, :]

    def rot(x):                                   # (B, T, H, D) -> (B, H, T, D)
        x = jnp.transpose(x, (0, 2, 1, 3))
        x1 = x[..., :half]
        x2 = x[..., half:rotary_dim]
        xp = x[..., rotary_dim:]
        return jnp.concatenate(
            [x1 * c - x2 * s, x1 * s + x2 * c, xp], axis=-1).astype(x.dtype)

    q = rot(qkv[:, :, 0])
    k = rot(qkv[:, :, 1])
    v = jnp.transpose(qkv[:, :, 2], (0, 2, 1, 3))
    return q, k, v


def phi_mha_forward(params, hidden_states, past_kv_cache=None,
                    attention_mask=None, *, num_heads, head_dim, sin, cos):
    b, seq_len, n_embd = hidden_states.shape
    x2d = hidden_states.reshape(b * seq_len, n_embd)
    qkv = linear(x2d, params["wqkv_w"], params["wqkv_b"],
                 out_dtype=params["wqkv_w"].dtype)
    qkv = qkv.reshape(b, seq_len, 3, num_heads, head_dim)

    # KV cache is stored head-major (B, H, S, D) in bf16 (avoids a transpose
    # per step and halves cache HBM traffic vs. the torch (B, S, H, D) f32).
    seqlen_offset = 0 if past_kv_cache is None else past_kv_cache[0].shape[2]
    q, k, v = apply_rotary_emb_qkv(qkv, sin, cos, seqlen_offset)
    if past_kv_cache is not None:
        # TODO(synk): replace concatenate with an aliased in-place KV-cache
        # write kernel (input_output_aliases) to avoid copying the cache.
        k = jnp.concatenate([past_kv_cache[0], k], axis=2)
        v = jnp.concatenate([past_kv_cache[1], v], axis=2)
    past_kv_cache = [k, v]

    s_len = k.shape[2]
    qh = q.reshape(b * num_heads, seq_len, head_dim)
    kh = k.reshape(b * num_heads, s_len, head_dim)
    vh = v.reshape(b * num_heads, s_len, head_dim)

    # Presence of attention_mask toggles the causal mask (matches the torch
    # module: mask contents are not consulted there either).
    attn = flash_attention(qh, kh, vh, attention_mask is not None)

    # TODO(synk): have the attention kernel write a lane-dense (B, T, H*D)
    # slab directly so this transpose disappears.
    attn = attn.reshape(b, num_heads, seq_len, head_dim)
    attn = jnp.transpose(attn, (0, 2, 1, 3)).reshape(
        b * seq_len, num_heads * head_dim)
    out = linear(attn, params["out_w"], params["out_b"],
                 out_dtype=hidden_states.dtype)
    return out.reshape(b, seq_len, -1), past_kv_cache


# --------------------------- pure-JAX reference ----------------------------- #

def _rotary_ref(x, sin, cos):
    t = x.shape[1]
    rotary_dim = cos.shape[1] * 2
    half = rotary_dim // 2
    c = cos[:t][:, None, :]
    s = sin[:t][:, None, :]
    x1, x2, xp = x[..., :half], x[..., half:rotary_dim], x[..., rotary_dim:]
    return jnp.concatenate([x1 * c - x2 * s, x1 * s + x2 * c, xp], axis=-1)


def phi_mha_reference(raw_params, hidden_states, *, num_heads, head_dim,
                      sin, cos, causal):
    b, t, n_embd = hidden_states.shape
    qkv = hidden_states @ raw_params["wqkv_w"] + raw_params["wqkv_b"]
    qkv = qkv.reshape(b, t, 3, num_heads, head_dim)
    q = _rotary_ref(qkv[:, :, 0], sin, cos)
    k = _rotary_ref(qkv[:, :, 1], sin, cos)
    v = qkv[:, :, 2]
    scale = 1.0 / math.sqrt(head_dim)
    attn = jnp.einsum("bthd,bshd->bhts", q, k * scale)
    if causal:
        attn = attn + jnp.triu(jnp.full((t, t), -10000.0, jnp.float32), 1)
    attn = jax.nn.softmax(attn, axis=-1)
    out = jnp.einsum("bhts,bshd->bthd", attn, v).reshape(
        b, t, num_heads * head_dim)
    return out @ raw_params["out_w"] + raw_params["out_b"]


# ---------------------------------- main ------------------------------------ #

if __name__ == "__main__":
    # Small Phi-like config.
    n_embd = 32
    n_head = 4
    head_dim = n_embd // n_head        # 8
    rotary_dim = 4
    n_positions = 64
    batch, seq = 2, 8

    key = jax.random.PRNGKey(0)
    k0, k1, k2, k3, k4, k5 = jax.random.split(key, 6)

    # Stored as (in, out): kernels compute x @ w + b (== torch Linear whose
    # weight has shape (out, in)).
    raw_params = {
        "wqkv_w": 0.02 * jax.random.normal(k0, (n_embd, 3 * n_embd), jnp.float32),
        "wqkv_b": 0.02 * jax.random.normal(k1, (1, 3 * n_embd), jnp.float32),
        "out_w": 0.02 * jax.random.normal(k2, (n_embd, n_embd), jnp.float32),
        "out_b": 0.02 * jax.random.normal(k3, (1, n_embd), jnp.float32),
    }
    params = prepare_params(raw_params, n_head, head_dim)
    sin, cos = make_rotary(rotary_dim, n_positions)

    hidden_states = jax.random.normal(k4, (batch, seq, n_embd), jnp.float32)
    attention_mask = jnp.ones((batch, seq), jnp.float32)  # presence => causal

    # ---- prefill ----
    out, kv_cache = phi_mha_forward(
        params, hidden_states, past_kv_cache=None,
        attention_mask=attention_mask,
        num_heads=n_head, head_dim=head_dim, sin=sin, cos=cos)
    out = jax.block_until_ready(out)
    jax.block_until_ready(kv_cache[0])

    ref = phi_mha_reference(
        raw_params, hidden_states,
        num_heads=n_head, head_dim=head_dim, sin=sin, cos=cos, causal=True)
    assert out.shape == (batch, seq, n_embd)
    # Tolerance covers bf16 matmul operands vs the f32 reference; structural
    # errors would be orders of magnitude larger.
    err = float(jnp.max(jnp.abs(out - ref)))
    assert jnp.allclose(out, ref, rtol=3e-2, atol=2e-3), err

    # ---- decode step with the KV cache (attention_mask=None, as in serving) --
    hidden_dec = jax.random.normal(k5, (batch, 1, n_embd), jnp.float32)
    out_dec, kv_cache = phi_mha_forward(
        params, hidden_dec, past_kv_cache=kv_cache, attention_mask=None,
        num_heads=n_head, head_dim=head_dim, sin=sin, cos=cos)
    out_dec = jax.block_until_ready(out_dec)

    ref_full = phi_mha_reference(
        raw_params, jnp.concatenate([hidden_states, hidden_dec], axis=1),
        num_heads=n_head, head_dim=head_dim, sin=sin, cos=cos, causal=True)
    err_dec = float(jnp.max(jnp.abs(out_dec - ref_full[:, -1:, :])))
    assert jnp.allclose(out_dec, ref_full[:, -1:, :], rtol=3e-2, atol=2e-3), err_dec

    print("KERNEL_OK")
</pallas_src>

<mosaic_0001>
module attributes {stable_mosaic.version = 11 : i64} {
  func.func @_linear_kernel(%arg0: i32, %arg1: i32, %arg2: i32, %arg3: memref<16x32xbf16, #tpu.memory_space<vmem>>, %arg4: memref<32x96xbf16, #tpu.memory_space<vmem>>, %arg5: memref<1x96xf32, #tpu.memory_space<vmem>>, %arg6: memref<16x96xbf16, #tpu.memory_space<vmem>>, %arg7: memref<16x96xf32, #tpu.memory_space<vmem>>) attributes {dimension_semantics = [#tpu.dimension_semantics<parallel>, #tpu.dimension_semantics<parallel>, #tpu.dimension_semantics<arbitrary>], iteration_bounds = array<i64: 1, 1, 1>, scalar_prefetch = 0 : i64, scratch_operands = 1 : i64, tpu.core_type = #tpu.core_type<tc>, window_params = [{transform_indices = @transform_0, window_bounds = array<i64: 16, 32>}, {transform_indices = @transform_1, window_bounds = array<i64: 32, 96>}, {transform_indices = @transform_2, window_bounds = array<i64: 1, 96>}, {transform_indices = @transform_3, window_bounds = array<i64: 16, 96>}]} {
    %c0_i32 = arith.constant 0 : i32
    %0 = arith.cmpi eq, %arg2, %c0_i32 : i32
    %1 = arith.extui %0 : i1 to i32
    %c0_i32_0 = arith.constant 0 : i32
    %2 = arith.cmpi ne, %1, %c0_i32_0 : i32
    scf.if %2 {
      %cst_10 = arith.constant 0.000000e+00 : f32
      %12 = vector.broadcast %cst_10 : f32 to vector<16x96xf32>
      %c0_11 = arith.constant 0 : index
      %c0_12 = arith.constant 0 : index
      %13 = vector.load %arg7[%c0_11, %c0_12] : memref<16x96xf32, #tpu.memory_space<vmem>>, vector<16x96xf32>
      tpu.vector_store %arg7[%c0_11, %c0_12], %12 {strides = array<i32>} : memref<16x96xf32, #tpu.memory_space<vmem>>, vector<16x96xf32>,
    } else {
    }
    %c0 = arith.constant 0 : index
    %c0_1 = arith.constant 0 : index
    %3 = vector.load %arg7[%c0, %c0_1] : memref<16x96xf32, #tpu.memory_space<vmem>>, vector<16x96xf32>
    %c0_2 = arith.constant 0 : index
    %c0_3 = arith.constant 0 : index
    %4 = vector.load %arg3[%c0_2, %c0_3] : memref<16x32xbf16, #tpu.memory_space<vmem>>, vector<16x32xbf16>
    %c0_4 = arith.constant 0 : index
    %c0_5 = arith.constant 0 : index
    %5 = vector.load %arg4[%c0_4, %c0_5] : memref<32x96xbf16, #tpu.memory_space<vmem>>, vector<32x96xbf16>
    %cst = arith.constant dense<0.000000e+00> : vector<16x96xf32>
    %6 = tpu.matmul %4, %5, %cst {dimension_numbers = #tpu.dot_dimension_numbers<[1], [0], [0], [1], [0, 0, 1, 1], [], []>} : vector<16x32xbf16>, vector<32x96xbf16>, vector<16x96xf32> -> vector<16x96xf32>
    %7 = arith.addf %3, %6 : vector<16x96xf32>
    %c0_6 = arith.constant 0 : index
    %c0_7 = arith.constant 0 : index
    %8 = vector.load %arg7[%c0_6, %c0_7] : memref<16x96xf32, #tpu.memory_space<vmem>>, vector<16x96xf32>
    tpu.vector_store %arg7[%c0_6, %c0_7], %7 {strides = array<i32>} : memref<16x96xf32, #tpu.memory_space<vmem>>, vector<16x96xf32>,
    %c0_i32_8 = arith.constant 0 : i32
    %9 = arith.cmpi eq, %arg2, %c0_i32_8 : i32
    %10 = arith.extui %9 : i1 to i32
    %c0_i32_9 = arith.constant 0 : i32
    %11 = arith.cmpi ne, %10, %c0_i32_9 : i32
    scf.if %11 {
      %c0_10 = arith.constant 0 : index
      %c0_11 = arith.constant 0 : index
      %12 = vector.load %arg7[%c0_10, %c0_11] : memref<16x96xf32, #tpu.memory_space<vmem>>, vector<16x96xf32>
      %c0_12 = arith.constant 0 : index
      %c0_13 = arith.constant 0 : index
      %13 = vector.load %arg5[%c0_12, %c0_13] : memref<1x96xf32, #tpu.memory_space<vmem>>, vector<1x96xf32>
      %14 = vector.broadcast %13 : vector<1x96xf32> to vector<16x96xf32>
      %15 = arith.addf %12, %14 : vector<16x96xf32>
      %16 = arith.truncf %15 : vector<16x96xf32> to vector<16x96xbf16>
      %c0_14 = arith.constant 0 : index
      %c0_15 = arith.constant 0 : index
      %17 = vector.load %arg6[%c0_14, %c0_15] : memref<16x96xbf16, #tpu.memory_space<vmem>>, vector<16x96xbf16>
      tpu.vector_store %arg6[%c0_14, %c0_15], %16 {strides = array<i32>} : memref<16x96xbf16, #tpu.memory_space<vmem>>, vector<16x96xbf16>,
    } else {
    }
    return
  }
  func.func @transform_0(%arg0: i32, %arg1: i32, %arg2: i32) -> (i32, i32) {
    %c0_i32 = arith.constant 0 : i32
    return %arg0, %arg2 : i32, i32
  }
  func.func @transform_1(%arg0: i32, %arg1: i32, %arg2: i32) -> (i32, i32) {
    %c0_i32 = arith.constant 0 : i32
    return %arg2, %arg1 : i32, i32
  }
  func.func @transform_2(%arg0: i32, %arg1: i32, %arg2: i32) -> (i32, i32) {
    %c0_i32 = arith.constant 0 : i32
    %c0_i32_0 = arith.constant 0 : i32
    return %c0_i32, %arg1 : i32, i32
  }
  func.func @transform_3(%arg0: i32, %arg1: i32, %arg2: i32) -> (i32, i32) {
    %c0_i32 = arith.constant 0 : i32
    return %arg0, %arg1 : i32, i32
  }
}

</mosaic_0001>

<llo_original>
// kernel: tpu_custom_call.1
$region0: #{tpu_custom_call.1}
  #allocation0 [shape = 'u32[]', space=smem, size = 0x4, offset = 0x4, fixed_abs, tag = 'smem constant byte address 0x4 - core index']
  #allocation1 [shape = 'u32[144,128]{1,0:T(1,128)}', space=vmem, size = 0x12000, scoped, tag = 'internal scratch']
  #allocation2 [shape = 'f32[16,96]{1,0:T(8,128)}', space=vmem, size = 0x2000, scoped, tag = 'scratch operand']
  %s0 = inlined_call_operand.hbm [shape: bf16[16,32], index: 0, kind: input, shape index: {}]
  %s1 = inlined_call_operand.hbm [shape: bf16[32,96], index: 1, kind: input, shape index: {}]
  %s2 = inlined_call_operand.vmem [shape: f32[1,96], index: 2, kind: input, shape index: {}]
  %s3 = inlined_call_operand.hbm [shape: bf16[16,96], index: 3, kind: output, shape index: {}]
  %s4 = sld [smem:[#allocation0]]
  $region38: #{tpu_custom_call.1} parent=0
    _
  %s6 = ssub.s32 1, %s4
  %s7 = scalar_select 0, %s6, %s4
  $region1: #{tpu_custom_call.1} parent=0
    #allocation3 [shape = 'u8[4096]{0}', space=vmem, size = 0x1000, scoped, tag = 'input window, operand 0, single buffered']
    #allocation4 [shape = 's32[1]{0}', space=sflag, size = 0x4, scoped, tag = 'scoped memory for tpu_custom_call.1']
    #allocation5 [shape = 's32[1]{0}', space=sflag, size = 0x4, scoped, tag = 'scoped memory for tpu_custom_call.1']
    #allocation6 [shape = 'u8[8192]{0}', space=vmem, size = 0x2000, scoped, tag = 'input window, operand 1, single buffered']
    #allocation7 [shape = 's32[1]{0}', space=sflag, size = 0x4, scoped, tag = 'scoped memory for tpu_custom_call.1']
    #allocation8 [shape = 'u8[4096]{0}', space=vmem, size = 0x1000, scoped, tag = 'output window, operand 0, single buffered']
    %8 = vsyncpa [#allocation4], 0
    %9 = vsyncpa [#allocation7], 0
    %10 = vsyncpa [#allocation5], 0
    // Predicated region
    $region2: #{tpu_custom_call.1} parent=1 // pred_check
      _
    $region3: #{tpu_custom_call.1} parent=1 // pred_check_branch
      %12 = sbr.rel (0) target = $region5
    $region4: #{tpu_custom_call.1} parent=1 // pred_region
      %s14 = ssub.s32 128, 128
      %15 = vsyncadd [#allocation4], %s14
      %s16 = sshll.u32 [#allocation3], 4
      %s17 = int_to_ptr.vmem [resolvable:$true] %s16
      %22 = dma.hbm_to_vmem [thread:$0]  %s0, 128, %s17, [#allocation4], 64, 64, 4
    $region5: #{tpu_custom_call.1} parent=1 // pred_fallthru
      _
    // Predicated region
    $region6: #{tpu_custom_call.1} parent=1 // pred_check
      _
    $region7: #{tpu_custom_call.1} parent=1 // pred_check_branch
      %24 = sbr.rel (0) target = $region9
    $region8: #{tpu_custom_call.1} parent=1 // pred_region
      %s26 = ssub.s32 256, 256
      %27 = vsyncadd [#allocation7], %s26
      %s28 = sshll.u32 [#allocation6], 4
      %s29 = int_to_ptr.vmem [resolvable:$true] %s28
      %34 = dma.hbm_to_vmem [thread:$0]  %s1, 256, %s29, [#allocation7], 64, 64, 4
    $region9: #{tpu_custom_call.1} parent=1 // pred_fallthru
      _
    // Predicated region
    $region10: #{tpu_custom_call.1} parent=1 // pred_check
      _
    $region11: #{tpu_custom_call.1} parent=1 // pred_check_branch
      %36 = sbr.rel (0) target = $region13
    $region12: #{tpu_custom_call.1} parent=1 // pred_region
      _
    $region13: #{tpu_custom_call.1} parent=1 // pred_fallthru
      _
    // Predicated region
    $region14: #{tpu_custom_call.1} parent=1 // pred_check
      _
    $region15: #{tpu_custom_call.1} parent=1 // pred_check_branch
      %38 = sbr.rel (0) target = $region17
    $region16: #{tpu_custom_call.1} parent=1 // pred_region
      %39 = dma.done [#allocation4], 128
    $region17: #{tpu_custom_call.1} parent=1 // pred_fallthru
      _
    // Predicated region
    $region18: #{tpu_custom_call.1} parent=1 // pred_check
      _
    $region19: #{tpu_custom_call.1} parent=1 // pred_check_branch
      %41 = sbr.rel (0) target = $region21
    $region20: #{tpu_custom_call.1} parent=1 // pred_region
      %42 = dma.done [#allocation7], 256
    $region21: #{tpu_custom_call.1} parent=1 // pred_fallthru
      _
    %p44 = scmp.eq.s32.totalorder 0, 0
    // Predicated region
    $region22: #{tpu_custom_call.1} parent=1 // pred_check
      %p45 = pneg %p44
    $region23: #{tpu_custom_call.1} parent=1 // pred_check_branch
      %47 = sbr.rel (%p45) target = $region25
    $region24: #{tpu_custom_call.1} parent=1 // pred_region
      %vm48 = vcmask 785408
      %49 = vst.msk [vmem:[#allocation2] sm:$0xff] %vm48, 0.0
      %50 = vst.msk [vmem:[#allocation2 + $0x8] sm:$0xff] %vm48, 0.0
    $region25: #{tpu_custom_call.1} parent=1 // pred_fallthru
      _
    %v51 = vld [vmem:[#allocation2] sm:$0xff]
    %v52 = vld [vmem:[#allocation2 + $0x8] sm:$0xff]
    %v53 = vld [vmem:[#allocation3] sm:$0xf]
    %v54 = vld [vmem:[#allocation3 + $0x4] sm:$0xf]
    %v55 = vld [vmem:[#allocation6] sm:$0xf]
    %v56 = vld [vmem:[#allocation6 + $0x4] sm:$0xf]
    %v57 = vld [vmem:[#allocation6 + $0x8] sm:$0xf]
    %v58 = vld [vmem:[#allocation6 + $0xc] sm:$0xf]
    %v61 = vunpack.c.l.b16 %v53
    %v62 = vunpack.c.l.b16 %v54
    %v63 = vpack.c.b16 %v62, %v61
    %v68 = vunpack.c.l.b16 %v55
    %v69 = vunpack.c.l.b16 %v56
    %v70 = vunpack.c.l.b16 %v57
    %v71 = vunpack.c.l.b16 %v58
    %v72 = vpack.c.b16 %v69, %v68
    %v73 = vpack.c.b16 %v71, %v70
    %vm76 = vcmask 261120
    %v78 = vsel %vm76, %v63, 0
    %80 = vmatprep.subr.bf16.mxu0 0
    %81 = vmatpush1.bf16.msra.mxu0 0
    %82 = vmatprep.subr.bf16.mxu0 0
    %83 = vmatpush1.bf16.msra.mxu0 0
    %84 = vmatprep.subr.bf16.mxu0 0
    %85 = vmatpush1.bf16.msra.mxu0 0
    %86 = vmatprep.subr.bf16.mxu0 0
    %87 = vmatpush1.bf16.msra.mxu0 0
    %88 = vmatprep.subr.bf16.mxu0 0
    %89 = vmatpush1.bf16.msra.mxu0 0
    %90 = vmatprep.subr.bf16.mxu0 0
    %91 = vmatpush1.bf16.msra.mxu0 0
    %92 = vmatprep.subr.bf16.mxu0 0
    %93 = vmatpush1.bf16.msra.mxu0 %v73
    %94 = vmatprep.subr.bf16.mxu0 0
    %95 = vmatpush1.bf16.msra.mxu0 %v72
    %96 = vmatprep.subr.bf16.mxu0 0
    %97 = vmatpush2.bf16.msra.mxu0 0
    %98 = vmatprep.subr.bf16.mxu0 0
    %99 = vmatpush2.bf16.msra.mxu0 0
    %100 = vmatprep.subr.bf16.mxu0 0
    %101 = vmatpush2.bf16.msra.mxu0 0
    %102 = vmatprep.subr.bf16.mxu0 0
    %103 = vmatpush2.bf16.msra.mxu0 0
    %104 = vmatprep.subr.bf16.mxu0 0
    %105 = vmatpush2.bf16.msra.mxu0 0
    %106 = vmatprep.subr.bf16.mxu0 0
    %107 = vmatpush2.bf16.msra.mxu0 0
    %108 = vmatprep.subr.bf16.mxu0 0
    %109 = vmatpush2.bf16.msra.mxu0 0
    %110 = vmatprep.subr.bf16.mxu0 0
    %111 = vmatpush2.bf16.msra.mxu0 0
    %112 = vmatprep.mubr.bf16.mxu0 0
    %113 = vmatmul.mubr.bf16.gmra.mxu0 %v78
    %v114 = vpop.f32.mrf.mxu0
    %v115 = vadd.f32 0.0, %v114
    %v116 = vpop.f32.mrf.mxu0
    %v117 = vpop.f32.mrf.mxu0
    %v118 = vadd.f32 0.0, %v117
    %v119 = vpop.f32.mrf.mxu0
    %120 = vdwg.mxu0
    %v121 = vadd.f32 %v51, %v115
    %v122 = vadd.f32 %v52, %v118
    %vm123 = vcmask 785408
    %124 = vst.msk [vmem:[#allocation2] sm:$0xff] %vm123, %v121
    %125 = vst.msk [vmem:[#allocation2 + $0x8] sm:$0xff] %vm123, %v122
    // Predicated region
    $region26: #{tpu_custom_call.1} parent=1 // pred_check
      %p126 = pneg %p44
    $region27: #{tpu_custom_call.1} parent=1 // pred_check_branch
      %128 = sbr.rel (%p126) target = $region29
    $region28: #{tpu_custom_call.1} parent=1 // pred_region
      %v129 = vld [vmem:[#allocation2] sm:$0xff]
      %v130 = vld [vmem:[#allocation2 + $0x8] sm:$0xff]
      %v131 = vld [vmem:[%s2] sm:$0x1]
      %v133 = vlaneseq
      %v134 = vshrl.u32 %v133, 7
      %v135 = vsub.s32 0, %v134
      %v136 = vrot.slane %v131, %v135
      %v138 = vadd.f32 %v129, %v136
      %v139 = vadd.f32 %v130, %v136
      %v140 = vpack.c.bf16 %v139, %v138
      %v142 = vunpack.c.l.b16 %v140
      %v143 = vunpack.c.h.b16 %v140
      %v144 = vpack.c.b16 %v142, %v142
      %v145 = vpack.c.b16 %v143, %v143
      %vm148 = vcmask 781312
      %149 = vst.msk [vmem:[#allocation8] sm:$0xf] %vm148, %v144
      %150 = vst.msk [vmem:[#allocation8 + $0x4] sm:$0xf] %vm148, %v145
    $region29: #{tpu_custom_call.1} parent=1 // pred_fallthru
      _
    // Predicated region
    $region30: #{tpu_custom_call.1} parent=1 // pred_check
      _
    $region31: #{tpu_custom_call.1} parent=1 // pred_check_branch
      %152 = sbr.rel (0) target = $region33
    $region32: #{tpu_custom_call.1} parent=1 // pred_region
      %s154 = ssub.s32 128, 128
      %155 = vsyncadd [#allocation5], %s154
      %s156 = sshll.u32 [#allocation8], 4
      %s157 = int_to_ptr.vmem [resolvable:$true] %s156
      %162 = dma.vmem_to_hbm [thread:$0]  %s157, 128, %s3, [#allocation5], 64, 64, 4
    $region33: #{tpu_custom_call.1} parent=1 // pred_fallthru
      _
    // Predicated region
    $region34: #{tpu_custom_call.1} parent=1 // pred_check
      _
    $region35: #{tpu_custom_call.1} parent=1 // pred_check_branch
      %164 = sbr.rel (0) target = $region37
    $region36: #{tpu_custom_call.1} parent=1 // pred_region
      %165 = dma.done [#allocation5], 128
    $region37: #{tpu_custom_call.1} parent=1 // pred_fallthru
      _
    %166 = vsyncpa [#allocation4], 1
    %167 = vsyncpa [#allocation7], 1
    %168 = vsyncpa [#allocation5], 1

</llo_original>
